<compile_context>
chip_gen: v6e
topology: v6e:2x2x1
jax: 0.10.0
libtpu: 0.0.40
codegen_flags: <defaults>
</compile_context>

<pallas_src>
import math

import jax
import jax.numpy as jnp
from jax.experimental import pallas as pl
from jax.experimental.pallas import tpu as pltpu

LANES = 128
SUBLANES = 8
MAX_BLOCK_ROWS = 8192            # 8192*128*4B = 4 MiB f32 tile
SMALL_PARAM_MAX_ELEMS = 16384    # smaller / irregular params go into a packed slab
VMEM_LIMIT_BYTES = 32 * 1024 * 1024


def _cdiv(a, b):
    return -(-a // b)


def _round_up(x, m):
    return _cdiv(x, m) * m


def _on_v7x():
    """Detect a 2-TensorCore chip so the grid can be sharded across cores."""
    try:
        kind = jax.devices()[0].device_kind.lower()
    except Exception:
        return False
    return ("v7" in kind) or ("tpu7" in kind)


# ----------------------------- Pallas kernel -----------------------------

def _ema_kernel(omd_ref, shadow_ref, param_ref, out_ref):
    # omd_ref: SMEM scalar-prefetch buffer, shape (1,), float32.
    omd = omd_ref[0]
    s = shadow_ref[...].astype(jnp.float32)
    p = param_ref[...].astype(jnp.float32)
    # shadow.sub_(one_minus_decay * (shadow - param)), computed in f32, stored
    # back in the shadow/param dtype.
    out_ref[...] = (s - omd * (s - p)).astype(out_ref.dtype)


def ema_update_slab(shadow_slab, param_slab, omd, *, block_rows, core_parallel=False):
    """In-place EMA update of a (rows, 128) shadow slab against a param slab.

    shadow_slab and param_slab share dtype and shape; the shadow input is
    aliased to the output (with jit donation the HBM buffer is reused).
    """
    rows, lanes = shadow_slab.shape
    assert lanes == LANES and param_slab.shape == (rows, LANES)
    grid = _cdiv(rows, block_rows)
    n = rows * LANES
    bytes_accessed = (2 * shadow_slab.dtype.itemsize + param_slab.dtype.itemsize) * n

    if core_parallel and grid > 1:
        dim_sem = (pltpu.CORE_PARALLEL,)   # shard the streaming loop over both TCs (v7x)
    else:
        dim_sem = ("parallel",)

    return pl.pallas_call(
        _ema_kernel,
        out_shape=jax.ShapeDtypeStruct((rows, LANES), shadow_slab.dtype),
        grid_spec=pltpu.PrefetchScalarGridSpec(
            num_scalar_prefetch=1,
            grid=(grid,),
            in_specs=[
                pl.BlockSpec((block_rows, LANES), lambda i, _: (i, 0)),
                pl.BlockSpec((block_rows, LANES), lambda i, _: (i, 0)),
            ],
            out_specs=pl.BlockSpec((block_rows, LANES), lambda i, _: (i, 0)),
        ),
        compiler_params=pltpu.CompilerParams(
            dimension_semantics=dim_sem,
            vmem_limit_bytes=VMEM_LIMIT_BYTES,
        ),
        cost_estimate=pl.CostEstimate(
            flops=3 * n, transcendentals=0, bytes_accessed=bytes_accessed),
        # Operand indices include the scalar-prefetch arg: (omd, shadow, param)
        # -> shadow is operand 1.  If this mapping ever changed, values would
        # still be correct (XLA inserts a protective copy) -- check HLO when in
        # doubt that the alias/donation actually holds.
        input_output_aliases={1: 0},
    )(omd, shadow_slab, param_slab)


# ----------------------- EMA "module" (JAX glue) --------------------------

class EMAModelPallas:
    """JAX/Pallas port of EMAModel_for_deepspeed_stage3.

    Shadow buffers live persistently on device: one (rows, 128) slab per large
    parameter (same dtype as the parameter) plus one packed slab per dtype for
    the small / irregular parameters.  forward() updates everything in place.
    """

    def __init__(self, model_params, decay=0.9999, use_num_updates=True):
        if decay < 0.0 or decay > 1.0:
            raise ValueError("Decay must be between 0 and 1")
        self.decay = float(decay)
        self.collected_params = []
        # int32 device scalar (original uses an int64 buffer; 32-bit is plenty).
        self.num_updates = jnp.asarray(0 if use_num_updates else -1, dtype=jnp.int32)

        self.param_names = list(model_params.keys())
        self.m_name2s_name = {k: k.replace(".", "") for k in self.param_names}
        self._shapes = {k: tuple(jnp.shape(model_params[k])) for k in self.param_names}
        self._dtypes = {k: jnp.asarray(model_params[k]).dtype for k in self.param_names}
        self._sizes = {k: int(math.prod(self._shapes[k])) if self._shapes[k] else 1
                       for k in self.param_names}

        # Partition params: "large" (own in-place kernel, no repacking) vs
        # "small/irregular" (packed into one slab per dtype each step).
        self._large = []
        self._small_groups = {}
        for k in self.param_names:
            size = self._sizes[k]
            if size >= SMALL_PARAM_MAX_ELEMS and size % LANES == 0:
                self._large.append(k)
            else:
                key = jnp.dtype(self._dtypes[k]).name
                self._small_groups.setdefault(key, []).append(k)

        # Large-param slab geometry (exact rows; boundary block handled by cdiv
        # grid -> no tail padding traffic).
        self._large_rows = {k: self._sizes[k] // LANES for k in self._large}
        self._large_block_rows = {
            k: min(MAX_BLOCK_ROWS, _round_up(self._large_rows[k], SUBLANES))
            for k in self._large}

        # Small-group slab geometry.
        self._group_rows = {}
        for key, names in self._small_groups.items():
            total = sum(self._sizes[n] for n in names)
            self._group_rows[key] = _round_up(_cdiv(total, LANES), SUBLANES)

        # Persistent shadow state (= clone of model params, in param dtype).
        shadows = {"large": {}, "small": {}}
        for k in self._large:
            shadows["large"][k] = jnp.reshape(
                jnp.asarray(model_params[k]), (self._large_rows[k], LANES))
        for key in self._small_groups:
            shadows["small"][key] = self._pack_small(model_params, key)
        self.shadows = shadows

        self._core_parallel = _on_v7x()
        # Shadow pytree donated so the aliased update is truly in place in HBM.
        self._step = jax.jit(self._make_step(), donate_argnums=(0,))

    # -- slab packing ------------------------------------------------------

    def _pack_small(self, params, key):
        names = self._small_groups[key]
        dtype = jnp.dtype(key)
        flat = jnp.concatenate(
            [jnp.ravel(jnp.asarray(params[n])).astype(dtype) for n in names])
        pad = self._group_rows[key] * LANES - flat.shape[0]
        if pad:
            flat = jnp.pad(flat, (0, pad))
        return flat.reshape(self._group_rows[key], LANES)

    # -- jitted step -------------------------------------------------------

    def _make_step(self):
        decay_const = jnp.float32(self.decay)
        large = list(self._large)
        large_rows = dict(self._large_rows)
        large_blocks = dict(self._large_block_rows)
        group_keys = list(self._small_groups.keys())
        group_rows = dict(self._group_rows)
        core_parallel = self._core_parallel
        pack_small = self._pack_small

        def step(shadows, num_updates, params):
            # decay / one_minus_decay computed on device -> no H2D, no recompile.
            nu = jnp.where(num_updates >= 0, num_updates + 1, num_updates)
            nu_f = nu.astype(jnp.float32)
            dyn = (1.0 + nu_f) / (10.0 + nu_f)
            decay = jnp.where(num_updates >= 0,
                              jnp.minimum(decay_const, dyn), decay_const)
            omd = jnp.reshape(1.0 - decay, (1,)).astype(jnp.float32)

            new_large = {}
            for name in large:
                # Contiguous reshape to a lane-dense view: no data movement.
                p2d = jnp.reshape(params[name], (large_rows[name], LANES))
                new_large[name] = ema_update_slab(
                    shadows["large"][name], p2d, omd,
                    block_rows=large_blocks[name], core_parallel=core_parallel)

            new_small = {}
            for key in group_keys:
                pslab = pack_small(params, key)   # only tiny params -> cheap
                new_small[key] = ema_update_slab(
                    shadows["small"][key], pslab, omd,
                    block_rows=group_rows[key], core_parallel=core_parallel)

            return {"large": new_large, "small": new_small}, nu

        return step

    # -- module API --------------------------------------------------------

    def forward(self, model_params):
        self.shadows, self.num_updates = self._step(
            self.shadows, self.num_updates, dict(model_params))
        return None  # matches the PyTorch forward (buffers updated in place)

    def shadow_values(self):
        """EMA shadow buffers keyed by shadow name, in param dtype."""
        out = {}
        for name in self._large:
            out[self.m_name2s_name[name]] = jnp.reshape(
                self.shadows["large"][name], self._shapes[name])
        for key, names in self._small_groups.items():
            flat = jnp.reshape(self.shadows["small"][key], (-1,))
            off = 0
            for n in names:
                size = self._sizes[n]
                out[self.m_name2s_name[n]] = jnp.reshape(
                    flat[off:off + size], self._shapes[n])
                off += size
        return out

    def copy_to(self):
        """EMA weights keyed by original parameter names, in original dtypes."""
        sh = self.shadow_values()
        return {k: sh[self.m_name2s_name[k]].astype(self._dtypes[k])
                for k in self.param_names}

    def store(self, model_params):
        self.collected_params = [jnp.array(model_params[k]) for k in self.param_names]

    def restore(self):
        return {k: v for k, v in zip(self.param_names, self.collected_params)}


# --------------------------------- main -----------------------------------

if __name__ == "__main__":
    key = jax.random.PRNGKey(0)
    k1, k2, k3, k4, k5, k6, k7 = jax.random.split(key, 7)

    # A tiny synthetic "model": conv + linear (small, packed path), a projection
    # matrix big enough to exercise the per-parameter in-place path, and a bf16
    # norm weight to exercise per-dtype grouping without f32 promotion.
    model_params = {
        "conv.weight": jax.random.normal(k1, (4, 4, 3, 3), jnp.float32),
        "conv.bias": jax.random.normal(k2, (4,), jnp.float32),
        "fc.weight": jax.random.normal(k3, (16, 32), jnp.float32),
        "fc.bias": jax.random.normal(k4, (16,), jnp.float32),
        "proj.weight": jax.random.normal(k5, (128, 256), jnp.float32),
        "norm.weight": jax.random.normal(k6, (32,), jnp.bfloat16),
    }

    ema = EMAModelPallas(model_params, decay=0.9999, use_num_updates=True)

    # Two "train steps": perturb the model params, run the EMA forward pass.
    def perturb(params, step):
        out = {}
        for i, (k, v) in enumerate(params.items()):
            kk = jax.random.fold_in(jax.random.fold_in(k7, step), i)
            out[k] = v + (0.1 * jax.random.normal(kk, v.shape, jnp.float32)).astype(v.dtype)
        return out

    p1 = perturb(model_params, 1)
    p2 = perturb(p1, 2)

    ema.forward(p1)
    ema.forward(p2)
    jax.block_until_ready(ema.shadows)

    # Reference (pure JAX, same f32-compute / cast-back-to-param-dtype math).
    ref_shadow = {k: jnp.asarray(v) for k, v in model_params.items()}
    for nu, pcur in ((1, p1), (2, p2)):
        nu_f = jnp.float32(nu)
        decay = jnp.minimum(jnp.float32(0.9999), (1.0 + nu_f) / (10.0 + nu_f))
        omd = jnp.float32(1.0) - decay
        new = {}
        for k, s in ref_shadow.items():
            s32 = s.astype(jnp.float32)
            p32 = pcur[k].astype(jnp.float32)
            new[k] = (s32 - omd * (s32 - p32)).astype(s.dtype)
        ref_shadow = new

    ema_weights = ema.copy_to()
    ok = True
    for name in model_params:
        a = ref_shadow[name].astype(jnp.float32)
        b = ema_weights[name].astype(jnp.float32)
        tol = 1e-5 if model_params[name].dtype == jnp.float32 else 2e-2
        if not jnp.allclose(a, b, atol=tol, rtol=tol):
            ok = False

    print("KERNEL_OK" if ok else "MISMATCH")
</pallas_src>

<mosaic_0001>
module attributes {stable_mosaic.version = 11 : i64} {
  func.func @_ema_kernel(%arg0: i32, %arg1: memref<1xf32, #tpu.memory_space<smem>>, %arg2: memref<8x128xbf16, #tpu.memory_space<vmem>>, %arg3: memref<8x128xbf16, #tpu.memory_space<vmem>>, %arg4: memref<8x128xbf16, #tpu.memory_space<vmem>>) attributes {dimension_semantics = [#tpu.dimension_semantics<parallel>], iteration_bounds = array<i64: 1>, scalar_prefetch = 1 : i64, scratch_operands = 0 : i64, tpu.core_type = #tpu.core_type<tc>, window_params = [{transform_indices = @transform_0, window_bounds = array<i64: 8, 128>}, {transform_indices = @transform_1, window_bounds = array<i64: 8, 128>}, {transform_indices = @transform_2, window_bounds = array<i64: 8, 128>}]} {
    %c0 = arith.constant 0 : index
    %0 = memref.load %arg1[%c0] : memref<1xf32, #tpu.memory_space<smem>>
    %c0_0 = arith.constant 0 : index
    %c0_1 = arith.constant 0 : index
    %1 = vector.load %arg2[%c0_0, %c0_1] : memref<8x128xbf16, #tpu.memory_space<vmem>>, vector<8x128xbf16>
    %2 = arith.extf %1 : vector<8x128xbf16> to vector<8x128xf32>
    %c0_2 = arith.constant 0 : index
    %c0_3 = arith.constant 0 : index
    %3 = vector.load %arg3[%c0_2, %c0_3] : memref<8x128xbf16, #tpu.memory_space<vmem>>, vector<8x128xbf16>
    %4 = arith.extf %3 : vector<8x128xbf16> to vector<8x128xf32>
    %5 = arith.subf %2, %4 : vector<8x128xf32>
    %6 = vector.broadcast %0 : f32 to vector<8x128xf32>
    %7 = arith.mulf %6, %5 : vector<8x128xf32>
    %8 = arith.subf %2, %7 : vector<8x128xf32>
    %9 = arith.truncf %8 : vector<8x128xf32> to vector<8x128xbf16>
    %c0_4 = arith.constant 0 : index
    %c0_5 = arith.constant 0 : index
    %10 = vector.load %arg4[%c0_4, %c0_5] : memref<8x128xbf16, #tpu.memory_space<vmem>>, vector<8x128xbf16>
    tpu.vector_store %arg4[%c0_4, %c0_5], %9 {strides = array<i32>} : memref<8x128xbf16, #tpu.memory_space<vmem>>, vector<8x128xbf16>,
    return
  }
  func.func @transform_0(%arg0: i32, %arg1: memref<1xf32, #tpu.memory_space<smem>>) -> (i32, i32) {
    %c0_i32 = arith.constant 0 : i32
    %c0_i32_0 = arith.constant 0 : i32
    return %arg0, %c0_i32 : i32, i32
  }
  func.func @transform_1(%arg0: i32, %arg1: memref<1xf32, #tpu.memory_space<smem>>) -> (i32, i32) {
    %c0_i32 = arith.constant 0 : i32
    %c0_i32_0 = arith.constant 0 : i32
    return %arg0, %c0_i32 : i32, i32
  }
  func.func @transform_2(%arg0: i32, %arg1: memref<1xf32, #tpu.memory_space<smem>>) -> (i32, i32) {
    %c0_i32 = arith.constant 0 : i32
    %c0_i32_0 = arith.constant 0 : i32
    return %arg0, %c0_i32 : i32, i32
  }
}

module attributes {stable_mosaic.version = 11 : i64} {
  func.func @_ema_kernel(%arg0: i32, %arg1: memref<1xf32, #tpu.memory_space<smem>>, %arg2: memref<8x128xf32, #tpu.memory_space<vmem>>, %arg3: memref<8x128xf32, #tpu.memory_space<vmem>>, %arg4: memref<8x128xf32, #tpu.memory_space<vmem>>) attributes {dimension_semantics = [#tpu.dimension_semantics<parallel>], iteration_bounds = array<i64: 1>, scalar_prefetch = 1 : i64, scratch_operands = 0 : i64, tpu.core_type = #tpu.core_type<tc>, window_params = [{transform_indices = @transform_0, window_bounds = array<i64: 8, 128>}, {transform_indices = @transform_1, window_bounds = array<i64: 8, 128>}, {transform_indices = @transform_2, window_bounds = array<i64: 8, 128>}]} {
    %c0 = arith.constant 0 : index
    %0 = memref.load %arg1[%c0] : memref<1xf32, #tpu.memory_space<smem>>
    %c0_0 = arith.constant 0 : index
    %c0_1 = arith.constant 0 : index
    %1 = vector.load %arg2[%c0_0, %c0_1] : memref<8x128xf32, #tpu.memory_space<vmem>>, vector<8x128xf32>
    %c0_2 = arith.constant 0 : index
    %c0_3 = arith.constant 0 : index
    %2 = vector.load %arg3[%c0_2, %c0_3] : memref<8x128xf32, #tpu.memory_space<vmem>>, vector<8x128xf32>
    %3 = arith.subf %1, %2 : vector<8x128xf32>
    %4 = vector.broadcast %0 : f32 to vector<8x128xf32>
    %5 = arith.mulf %4, %3 : vector<8x128xf32>
    %6 = arith.subf %1, %5 : vector<8x128xf32>
    %c0_4 = arith.constant 0 : index
    %c0_5 = arith.constant 0 : index
    %7 = vector.load %arg4[%c0_4, %c0_5] : memref<8x128xf32, #tpu.memory_space<vmem>>, vector<8x128xf32>
    tpu.vector_store %arg4[%c0_4, %c0_5], %6 {strides = array<i32>} : memref<8x128xf32, #tpu.memory_space<vmem>>, vector<8x128xf32>,
    return
  }
  func.func @transform_0(%arg0: i32, %arg1: memref<1xf32, #tpu.memory_space<smem>>) -> (i32, i32) {
    %c0_i32 = arith.constant 0 : i32
    %c0_i32_0 = arith.constant 0 : i32
    return %arg0, %c0_i32 : i32, i32
  }
  func.func @transform_1(%arg0: i32, %arg1: memref<1xf32, #tpu.memory_space<smem>>) -> (i32, i32) {
    %c0_i32 = arith.constant 0 : i32
    %c0_i32_0 = arith.constant 0 : i32
    return %arg0, %c0_i32 : i32, i32
  }
  func.func @transform_2(%arg0: i32, %arg1: memref<1xf32, #tpu.memory_space<smem>>) -> (i32, i32) {
    %c0_i32 = arith.constant 0 : i32
    %c0_i32_0 = arith.constant 0 : i32
    return %arg0, %c0_i32 : i32, i32
  }
}

module attributes {stable_mosaic.version = 11 : i64} {
  func.func @_ema_kernel(%arg0: i32, %arg1: memref<1xf32, #tpu.memory_space<smem>>, %arg2: memref<256x128xf32, #tpu.memory_space<vmem>>, %arg3: memref<256x128xf32, #tpu.memory_space<vmem>>, %arg4: memref<256x128xf32, #tpu.memory_space<vmem>>) attributes {dimension_semantics = [#tpu.dimension_semantics<parallel>], iteration_bounds = array<i64: 1>, scalar_prefetch = 1 : i64, scratch_operands = 0 : i64, tpu.core_type = #tpu.core_type<tc>, window_params = [{transform_indices = @transform_0, window_bounds = array<i64: 256, 128>}, {transform_indices = @transform_1, window_bounds = array<i64: 256, 128>}, {transform_indices = @transform_2, window_bounds = array<i64: 256, 128>}]} {
    %c0 = arith.constant 0 : index
    %0 = memref.load %arg1[%c0] : memref<1xf32, #tpu.memory_space<smem>>
    %c0_0 = arith.constant 0 : index
    %c0_1 = arith.constant 0 : index
    %1 = vector.load %arg2[%c0_0, %c0_1] : memref<256x128xf32, #tpu.memory_space<vmem>>, vector<256x128xf32>
    %c0_2 = arith.constant 0 : index
    %c0_3 = arith.constant 0 : index
    %2 = vector.load %arg3[%c0_2, %c0_3] : memref<256x128xf32, #tpu.memory_space<vmem>>, vector<256x128xf32>
    %3 = arith.subf %1, %2 : vector<256x128xf32>
    %4 = vector.broadcast %0 : f32 to vector<256x128xf32>
    %5 = arith.mulf %4, %3 : vector<256x128xf32>
    %6 = arith.subf %1, %5 : vector<256x128xf32>
    %c0_4 = arith.constant 0 : index
    %c0_5 = arith.constant 0 : index
    %7 = vector.load %arg4[%c0_4, %c0_5] : memref<256x128xf32, #tpu.memory_space<vmem>>, vector<256x128xf32>
    tpu.vector_store %arg4[%c0_4, %c0_5], %6 {strides = array<i32>} : memref<256x128xf32, #tpu.memory_space<vmem>>, vector<256x128xf32>,
    return
  }
  func.func @transform_0(%arg0: i32, %arg1: memref<1xf32, #tpu.memory_space<smem>>) -> (i32, i32) {
    %c0_i32 = arith.constant 0 : i32
    %c0_i32_0 = arith.constant 0 : i32
    return %arg0, %c0_i32 : i32, i32
  }
  func.func @transform_1(%arg0: i32, %arg1: memref<1xf32, #tpu.memory_space<smem>>) -> (i32, i32) {
    %c0_i32 = arith.constant 0 : i32
    %c0_i32_0 = arith.constant 0 : i32
    return %arg0, %c0_i32 : i32, i32
  }
  func.func @transform_2(%arg0: i32, %arg1: memref<1xf32, #tpu.memory_space<smem>>) -> (i32, i32) {
    %c0_i32 = arith.constant 0 : i32
    %c0_i32_0 = arith.constant 0 : i32
    return %arg0, %c0_i32 : i32, i32
  }
}

</mosaic_0001>

<llo_original>
// kernel: step.5
$region0: #{step.5}
  #allocation0 [shape = 'u32[]', space=smem, size = 0x4, offset = 0x4, fixed_abs, tag = 'smem constant byte address 0x4 - core index']
  #allocation1 [shape = 'u32[144,128]{1,0:T(1,128)}', space=vmem, size = 0x12000, scoped, tag = 'internal scratch']
  #allocation2 [shape = 's32[1]{0}', space=sflag, size = 0x4, scoped, tag = 'scoped memory for step.5']
  #allocation3 [shape = 'f32[1]{0:T(128)S(6)}', space=smem, size = 0x200, scoped, tag = 'prefetched SMEM operand 0']
  %s0 = inlined_call_operand.<no memory space> [shape: f32[1], index: 0, kind: input, shape index: {}]
  %s1 = inlined_call_operand.hbm [shape: bf16[8,128], index: 1, kind: input, shape index: {}, may-alias: {1,3}]
  %s2 = inlined_call_operand.vmem [shape: bf16[8,128], index: 2, kind: input, shape index: {}]
  %s3 = inlined_call_operand.hbm [shape: bf16[8,128], index: 3, kind: output, shape index: {}, may-alias: {1,3}]
  %s4 = sld [smem:[#allocation0]]
  $region22: #{step.5} parent=0
    _
  %s6 = ssub.s32 1, %s4
  %s7 = scalar_select 0, %s6, %s4
  %8 = sst [smem:[#allocation3]] %s0
  $region1: #{step.5} parent=0
    #allocation4 [shape = 'u8[2048]{0}', space=vmem, size = 0x800, scoped, tag = 'input window, operand 1, single buffered']
    #allocation5 [shape = 's32[1]{0}', space=sflag, size = 0x4, scoped, tag = 'scoped memory for step.5']
    #allocation6 [shape = 's32[1]{0}', space=sflag, size = 0x4, scoped, tag = 'scoped memory for step.5']
    #allocation7 [shape = 'u8[2048]{0}', space=vmem, size = 0x800, scoped, tag = 'output window, operand 0, single buffered']
    %9 = vsyncpa [#allocation5], 0
    %10 = vsyncpa [#allocation6], 0
    // Predicated region
    $region2: #{step.5} parent=1 // pred_check
      _
    $region3: #{step.5} parent=1 // pred_check_branch
      %12 = sbr.rel (0) target = $region5
    $region4: #{step.5} parent=1 // pred_region
      %s14 = ssub.s32 64, 64
      %15 = vsyncadd [#allocation5], %s14
      %s17 = sshll.u32 [#allocation4], 4
      %s18 = int_to_ptr.vmem [resolvable:$true] %s17
      %20 = dma.hbm_to_vmem [thread:$0]  %s1, 64, %s18, [#allocation5]
    $region5: #{step.5} parent=1 // pred_fallthru
      _
    // Predicated region
    $region6: #{step.5} parent=1 // pred_check
      _
    $region7: #{step.5} parent=1 // pred_check_branch
      %22 = sbr.rel (0) target = $region9
    $region8: #{step.5} parent=1 // pred_region
      _
    $region9: #{step.5} parent=1 // pred_fallthru
      _
    // Predicated region
    $region10: #{step.5} parent=1 // pred_check
      _
    $region11: #{step.5} parent=1 // pred_check_branch
      %24 = sbr.rel (0) target = $region13
    $region12: #{step.5} parent=1 // pred_region
      %25 = dma.done [#allocation5], 64
    $region13: #{step.5} parent=1 // pred_fallthru
      _
    %s26 = sld [smem:[#allocation3]]
    %v27 = vld [vmem:[#allocation4] sm:$0xf]
    %v28 = vunpack.c.l.bf16 %v27
    %v29 = vld [vmem:[%s2] sm:$0xf]
    %v30 = vunpack.c.l.bf16 %v29
    %v31 = vsub.f32 %v28, %v30
    %v32 = vstv %s26
    %v33 = vmul.f32 %v32, %v31
    %v34 = vsub.f32 %v28, %v33
    %v35 = vpack.c.bf16 %v34, %v34
    %36 = vst [vmem:[#allocation7] sm:$0xf] %v35
    // Predicated region
    $region14: #{step.5} parent=1 // pred_check
      _
    $region15: #{step.5} parent=1 // pred_check_branch
      %38 = sbr.rel (0) target = $region17
    $region16: #{step.5} parent=1 // pred_region
      %s40 = ssub.s32 64, 64
      %41 = vsyncadd [#allocation6], %s40
      %s43 = sshll.u32 [#allocation7], 4
      %s44 = int_to_ptr.vmem [resolvable:$true] %s43
      %46 = dma.vmem_to_hbm [thread:$0]  %s44, 64, %s3, [#allocation6]
    $region17: #{step.5} parent=1 // pred_fallthru
      _
    // Predicated region
    $region18: #{step.5} parent=1 // pred_check
      _
    $region19: #{step.5} parent=1 // pred_check_branch
      %48 = sbr.rel (0) target = $region21
    $region20: #{step.5} parent=1 // pred_region
      %49 = dma.done [#allocation6], 64
    $region21: #{step.5} parent=1 // pred_fallthru
      _
    %50 = vsyncpa [#allocation5], 1
    %51 = vsyncpa [#allocation6], 1

// kernel: step.4
$region0: #{step.4}
  #allocation0 [shape = 'u32[]', space=smem, size = 0x4, offset = 0x4, fixed_abs, tag = 'smem constant byte address 0x4 - core index']
  #allocation1 [shape = 'u32[144,128]{1,0:T(1,128)}', space=vmem, size = 0x12000, scoped, tag = 'internal scratch']
  #allocation2 [shape = 's32[1]{0}', space=sflag, size = 0x4, scoped, tag = 'scoped memory for step.4']
  #allocation3 [shape = 'f32[1]{0:T(128)S(6)}', space=smem, size = 0x200, scoped, tag = 'prefetched SMEM operand 0']
  %s0 = inlined_call_operand.<no memory space> [shape: f32[1], index: 0, kind: input, shape index: {}]
  %s1 = inlined_call_operand.vmem [shape: f32[8,128], index: 1, kind: input, shape index: {}, may-alias: {1,3}]
  %s2 = inlined_call_operand.vmem [shape: f32[8,128], index: 2, kind: input, shape index: {}]
  %s3 = inlined_call_operand.vmem [shape: f32[8,128], index: 3, kind: output, shape index: {}, may-alias: {1,3}]
  %s4 = sld [smem:[#allocation0]]
  $region18: #{step.4} parent=0
    _
  %s6 = ssub.s32 1, %s4
  %s7 = scalar_select 0, %s6, %s4
  %8 = sst [smem:[#allocation3]] %s0
  // Predicated region
  $region2: #{step.4} parent=0 // pred_check
    _
  $region3: #{step.4} parent=0 // pred_check_branch
    %10 = sbr.rel (0) target = $region5
  $region4: #{step.4} parent=0 // pred_region
    _
  $region5: #{step.4} parent=0 // pred_fallthru
    _
  // Predicated region
  $region6: #{step.4} parent=0 // pred_check
    _
  $region7: #{step.4} parent=0 // pred_check_branch
    %12 = sbr.rel (0) target = $region9
  $region8: #{step.4} parent=0 // pred_region
    _
  $region9: #{step.4} parent=0 // pred_fallthru
    _
  %s13 = sld [smem:[#allocation3]]
  %v14 = vld [vmem:[%s1] sm:$0xff]
  %v15 = vld [vmem:[%s2] sm:$0xff]
  %v16 = vsub.f32 %v14, %v15
  %v17 = vstv %s13
  %v18 = vmul.f32 %v17, %v16
  %v19 = vsub.f32 %v14, %v18
  %20 = vst [vmem:[%s3] sm:$0xff] %v19
  // Predicated region
  $region10: #{step.4} parent=0 // pred_check
    _
  $region11: #{step.4} parent=0 // pred_check_branch
    %22 = sbr.rel (0) target = $region13
  $region12: #{step.4} parent=0 // pred_region
    _
  $region13: #{step.4} parent=0 // pred_fallthru
    _
  // Predicated region
  $region14: #{step.4} parent=0 // pred_check
    _
  $region15: #{step.4} parent=0 // pred_check_branch
    %24 = sbr.rel (0) target = $region17
  $region16: #{step.4} parent=0 // pred_region
    _
  $region17: #{step.4} parent=0 // pred_fallthru
    _

// kernel: step.3
$region0: #{step.3}
  #allocation0 [shape = 'u32[]', space=smem, size = 0x4, offset = 0x4, fixed_abs, tag = 'smem constant byte address 0x4 - core index']
  #allocation1 [shape = 'u32[144,128]{1,0:T(1,128)}', space=vmem, size = 0x12000, scoped, tag = 'internal scratch']
  #allocation2 [shape = 's32[1]{0}', space=sflag, size = 0x4, scoped, tag = 'scoped memory for step.3']
  #allocation3 [shape = 'f32[1]{0:T(128)S(6)}', space=smem, size = 0x200, scoped, tag = 'prefetched SMEM operand 0']
  %s0 = inlined_call_operand.<no memory space> [shape: f32[1], index: 0, kind: input, shape index: {}]
  %s1 = inlined_call_operand.vmem [shape: f32[256,128], index: 1, kind: input, shape index: {}, may-alias: {1,3}]
  %s2 = inlined_call_operand.vmem [shape: f32[256,128], index: 2, kind: input, shape index: {}]
  %s3 = inlined_call_operand.vmem [shape: f32[256,128], index: 3, kind: output, shape index: {}, may-alias: {1,3}]
  %s4 = sld [smem:[#allocation0]]
  $region18: #{step.3} parent=0
    _
  %s6 = ssub.s32 1, %s4
  %s7 = scalar_select 0, %s6, %s4
  %8 = sst [smem:[#allocation3]] %s0
  // Predicated region
  $region2: #{step.3} parent=0 // pred_check
    _
  $region3: #{step.3} parent=0 // pred_check_branch
    %10 = sbr.rel (0) target = $region5
  $region4: #{step.3} parent=0 // pred_region
    _
  $region5: #{step.3} parent=0 // pred_fallthru
    _
  // Predicated region
  $region6: #{step.3} parent=0 // pred_check
    _
  $region7: #{step.3} parent=0 // pred_check_branch
    %12 = sbr.rel (0) target = $region9
  $region8: #{step.3} parent=0 // pred_region
    _
  $region9: #{step.3} parent=0 // pred_fallthru
    _
  %s13 = sld [smem:[#allocation3]]
  %v14 = vld [vmem:[%s1] sm:$0xff]
  %v15 = vld [vmem:[%s1 + $0x8] sm:$0xff]
  %v16 = vld [vmem:[%s1 + $0x10] sm:$0xff]
  %v17 = vld [vmem:[%s1 + $0x18] sm:$0xff]
  %v18 = vld [vmem:[%s1 + $0x20] sm:$0xff]
  %v19 = vld [vmem:[%s1 + $0x28] sm:$0xff]
  %v20 = vld [vmem:[%s1 + $0x30] sm:$0xff]
  %v21 = vld [vmem:[%s1 + $0x38] sm:$0xff]
  %v22 = vld [vmem:[%s1 + $0x40] sm:$0xff]
  %v23 = vld [vmem:[%s1 + $0x48] sm:$0xff]
  %v24 = vld [vmem:[%s1 + $0x50] sm:$0xff]
  %v25 = vld [vmem:[%s1 + $0x58] sm:$0xff]
  %v26 = vld [vmem:[%s1 + $0x60] sm:$0xff]
  %v27 = vld [vmem:[%s1 + $0x68] sm:$0xff]
  %v28 = vld [vmem:[%s1 + $0x70] sm:$0xff]
  %v29 = vld [vmem:[%s1 + $0x78] sm:$0xff]
  %v30 = vld [vmem:[%s1 + $0x80] sm:$0xff]
  %v31 = vld [vmem:[%s1 + $0x88] sm:$0xff]
  %v32 = vld [vmem:[%s1 + $0x90] sm:$0xff]
  %v33 = vld [vmem:[%s1 + $0x98] sm:$0xff]
  %v34 = vld [vmem:[%s1 + $0xa0] sm:$0xff]
  %v35 = vld [vmem:[%s1 + $0xa8] sm:$0xff]
  %v36 = vld [vmem:[%s1 + $0xb0] sm:$0xff]
  %v37 = vld [vmem:[%s1 + $0xb8] sm:$0xff]
  %v38 = vld [vmem:[%s1 + $0xc0] sm:$0xff]
  %v39 = vld [vmem:[%s1 + $0xc8] sm:$0xff]
  %v40 = vld [vmem:[%s1 + $0xd0] sm:$0xff]
  %v41 = vld [vmem:[%s1 + $0xd8] sm:$0xff]
  %v42 = vld [vmem:[%s1 + $0xe0] sm:$0xff]
  %v43 = vld [vmem:[%s1 + $0xe8] sm:$0xff]
  %v44 = vld [vmem:[%s1 + $0xf0] sm:$0xff]
  %v45 = vld [vmem:[%s1 + $0xf8] sm:$0xff]
  %v46 = vld [vmem:[%s2] sm:$0xff]
  %v47 = vld [vmem:[%s2 + $0x8] sm:$0xff]
  %v48 = vld [vmem:[%s2 + $0x10] sm:$0xff]
  %v49 = vld [vmem:[%s2 + $0x18] sm:$0xff]
  %v50 = vld [vmem:[%s2 + $0x20] sm:$0xff]
  %v51 = vld [vmem:[%s2 + $0x28] sm:$0xff]
  %v52 = vld [vmem:[%s2 + $0x30] sm:$0xff]
  %v53 = vld [vmem:[%s2 + $0x38] sm:$0xff]
  %v54 = vld [vmem:[%s2 + $0x40] sm:$0xff]
  %v55 = vld [vmem:[%s2 + $0x48] sm:$0xff]
  %v56 = vld [vmem:[%s2 + $0x50] sm:$0xff]
  %v57 = vld [vmem:[%s2 + $0x58] sm:$0xff]
  %v58 = vld [vmem:[%s2 + $0x60] sm:$0xff]
  %v59 = vld [vmem:[%s2 + $0x68] sm:$0xff]
  %v60 = vld [vmem:[%s2 + $0x70] sm:$0xff]
  %v61 = vld [vmem:[%s2 + $0x78] sm:$0xff]
  %v62 = vld [vmem:[%s2 + $0x80] sm:$0xff]
  %v63 = vld [vmem:[%s2 + $0x88] sm:$0xff]
  %v64 = vld [vmem:[%s2 + $0x90] sm:$0xff]
  %v65 = vld [vmem:[%s2 + $0x98] sm:$0xff]
  %v66 = vld [vmem:[%s2 + $0xa0] sm:$0xff]
  %v67 = vld [vmem:[%s2 + $0xa8] sm:$0xff]
  %v68 = vld [vmem:[%s2 + $0xb0] sm:$0xff]
  %v69 = vld [vmem:[%s2 + $0xb8] sm:$0xff]
  %v70 = vld [vmem:[%s2 + $0xc0] sm:$0xff]
  %v71 = vld [vmem:[%s2 + $0xc8] sm:$0xff]
  %v72 = vld [vmem:[%s2 + $0xd0] sm:$0xff]
  %v73 = vld [vmem:[%s2 + $0xd8] sm:$0xff]
  %v74 = vld [vmem:[%s2 + $0xe0] sm:$0xff]
  %v75 = vld [vmem:[%s2 + $0xe8] sm:$0xff]
  %v76 = vld [vmem:[%s2 + $0xf0] sm:$0xff]
  %v77 = vld [vmem:[%s2 + $0xf8] sm:$0xff]
  %v78 = vsub.f32 %v14, %v46
  %v79 = vsub.f32 %v15, %v47
  %v80 = vsub.f32 %v16, %v48
  %v81 = vsub.f32 %v17, %v49
  %v82 = vsub.f32 %v18, %v50
  %v83 = vsub.f32 %v19, %v51
  %v84 = vsub.f32 %v20, %v52
  %v85 = vsub.f32 %v21, %v53
  %v86 = vsub.f32 %v22, %v54
  %v87 = vsub.f32 %v23, %v55
  %v88 = vsub.f32 %v24, %v56
  %v89 = vsub.f32 %v25, %v57
  %v90 = vsub.f32 %v26, %v58
  %v91 = vsub.f32 %v27, %v59
  %v92 = vsub.f32 %v28, %v60
  %v93 = vsub.f32 %v29, %v61
  %v94 = vsub.f32 %v30, %v62
  %v95 = vsub.f32 %v31, %v63
  %v96 = vsub.f32 %v32, %v64
  %v97 = vsub.f32 %v33, %v65
  %v98 = vsub.f32 %v34, %v66
  %v99 = vsub.f32 %v35, %v67
  %v100 = vsub.f32 %v36, %v68
  %v101 = vsub.f32 %v37, %v69
  %v102 = vsub.f32 %v38, %v70
  %v103 = vsub.f32 %v39, %v71
  %v104 = vsub.f32 %v40, %v72
  %v105 = vsub.f32 %v41, %v73
  %v106 = vsub.f32 %v42, %v74
  %v107 = vsub.f32 %v43, %v75
  %v108 = vsub.f32 %v44, %v76
  %v109 = vsub.f32 %v45, %v77
  %v110 = vstv %s13
  %v111 = vmul.f32 %v110, %v78
  %v112 = vmul.f32 %v110, %v79
  %v113 = vmul.f32 %v110, %v80
  %v114 = vmul.f32 %v110, %v81
  %v115 = vmul.f32 %v110, %v82
  %v116 = vmul.f32 %v110, %v83
  %v117 = vmul.f32 %v110, %v84
  %v118 = vmul.f32 %v110, %v85
  %v119 = vmul.f32 %v110, %v86
  %v120 = vmul.f32 %v110, %v87
  %v121 = vmul.f32 %v110, %v88
  %v122 = vmul.f32 %v110, %v89
  %v123 = vmul.f32 %v110, %v90
  %v124 = vmul.f32 %v110, %v91
  %v125 = vmul.f32 %v110, %v92
  %v126 = vmul.f32 %v110, %v93
  %v127 = vmul.f32 %v110, %v94
  %v128 = vmul.f32 %v110, %v95
  %v129 = vmul.f32 %v110, %v96
  %v130 = vmul.f32 %v110, %v97
  %v131 = vmul.f32 %v110, %v98
  %v132 = vmul.f32 %v110, %v99
  %v133 = vmul.f32 %v110, %v100
  %v134 = vmul.f32 %v110, %v101
  %v135 = vmul.f32 %v110, %v102
  %v136 = vmul.f32 %v110, %v103
  %v137 = vmul.f32 %v110, %v104
  %v138 = vmul.f32 %v110, %v105
  %v139 = vmul.f32 %v110, %v106
  %v140 = vmul.f32 %v110, %v107
  %v141 = vmul.f32 %v110, %v108
  %v142 = vmul.f32 %v110, %v109
  %v143 = vsub.f32 %v14, %v111
  %v144 = vsub.f32 %v15, %v112
  %v145 = vsub.f32 %v16, %v113
  %v146 = vsub.f32 %v17, %v114
  %v147 = vsub.f32 %v18, %v115
  %v148 = vsub.f32 %v19, %v116
  %v149 = vsub.f32 %v20, %v117
  %v150 = vsub.f32 %v21, %v118
  %v151 = vsub.f32 %v22, %v119
  %v152 = vsub.f32 %v23, %v120
  %v153 = vsub.f32 %v24, %v121
  %v154 = vsub.f32 %v25, %v122
  %v155 = vsub.f32 %v26, %v123
  %v156 = vsub.f32 %v27, %v124
  %v157 = vsub.f32 %v28, %v125
  %v158 = vsub.f32 %v29, %v126
  %v159 = vsub.f32 %v30, %v127
  %v160 = vsub.f32 %v31, %v128
  %v161 = vsub.f32 %v32, %v129
  %v162 = vsub.f32 %v33, %v130
  %v163 = vsub.f32 %v34, %v131
  %v164 = vsub.f32 %v35, %v132
  %v165 = vsub.f32 %v36, %v133
  %v166 = vsub.f32 %v37, %v134
  %v167 = vsub.f32 %v38, %v135
  %v168 = vsub.f32 %v39, %v136
  %v169 = vsub.f32 %v40, %v137
  %v170 = vsub.f32 %v41, %v138
  %v171 = vsub.f32 %v42, %v139
  %v172 = vsub.f32 %v43, %v140
  %v173 = vsub.f32 %v44, %v141
  %v174 = vsub.f32 %v45, %v142
  %175 = vst [vmem:[%s3] sm:$0xff] %v143
  %176 = vst [vmem:[%s3 + $0x8] sm:$0xff] %v144
  %177 = vst [vmem:[%s3 + $0x10] sm:$0xff] %v145
  %178 = vst [vmem:[%s3 + $0x18] sm:$0xff] %v146
  %179 = vst [vmem:[%s3 + $0x20] sm:$0xff] %v147
  %180 = vst [vmem:[%s3 + $0x28] sm:$0xff] %v148
  %181 = vst [vmem:[%s3 + $0x30] sm:$0xff] %v149
  %182 = vst [vmem:[%s3 + $0x38] sm:$0xff] %v150
  %183 = vst [vmem:[%s3 + $0x40] sm:$0xff] %v151
  %184 = vst [vmem:[%s3 + $0x48] sm:$0xff] %v152
  %185 = vst [vmem:[%s3 + $0x50] sm:$0xff] %v153
  %186 = vst [vmem:[%s3 + $0x58] sm:$0xff] %v154
  %187 = vst [vmem:[%s3 + $0x60] sm:$0xff] %v155
  %188 = vst [vmem:[%s3 + $0x68] sm:$0xff] %v156
  %189 = vst [vmem:[%s3 + $0x70] sm:$0xff] %v157
  %190 = vst [vmem:[%s3 + $0x78] sm:$0xff] %v158
  %191 = vst [vmem:[%s3 + $0x80] sm:$0xff] %v159
  %192 = vst [vmem:[%s3 + $0x88] sm:$0xff] %v160
  %193 = vst [vmem:[%s3 + $0x90] sm:$0xff] %v161
  %194 = vst [vmem:[%s3 + $0x98] sm:$0xff] %v162
  %195 = vst [vmem:[%s3 + $0xa0] sm:$0xff] %v163
  %196 = vst [vmem:[%s3 + $0xa8] sm:$0xff] %v164
  %197 = vst [vmem:[%s3 + $0xb0] sm:$0xff] %v165
  %198 = vst [vmem:[%s3 + $0xb8] sm:$0xff] %v166
  %199 = vst [vmem:[%s3 + $0xc0] sm:$0xff] %v167
  %200 = vst [vmem:[%s3 + $0xc8] sm:$0xff] %v168
  %201 = vst [vmem:[%s3 + $0xd0] sm:$0xff] %v169
  %202 = vst [vmem:[%s3 + $0xd8] sm:$0xff] %v170
  %203 = vst [vmem:[%s3 + $0xe0] sm:$0xff] %v171
  %204 = vst [vmem:[%s3 + $0xe8] sm:$0xff] %v172
  %205 = vst [vmem:[%s3 + $0xf0] sm:$0xff] %v173
  %206 = vst [vmem:[%s3 + $0xf8] sm:$0xff] %v174
  // Predicated region
  $region10: #{step.3} parent=0 // pred_check
    _
  $region11: #{step.3} parent=0 // pred_check_branch
    %208 = sbr.rel (0) target = $region13
  $region12: #{step.3} parent=0 // pred_region
    _
  $region13: #{step.3} parent=0 // pred_fallthru
    _
  // Predicated region
  $region14: #{step.3} parent=0 // pred_check
    _
  $region15: #{step.3} parent=0 // pred_check_branch
    %210 = sbr.rel (0) target = $region17
  $region16: #{step.3} parent=0 // pred_region
    _
  $region17: #{step.3} parent=0 // pred_fallthru
    _

</llo_original>
